<compile_context>
chip_gen: v7x
topology: tpu7x:2x2x1
jax: 0.10.0
libtpu: 0.0.40
codegen_flags: <defaults>
</compile_context>

<pallas_src>
import functools

import jax
import jax.numpy as jnp
import numpy as np
from jax.experimental import pallas as pl
from jax.experimental.pallas import tpu as pltpu


def _mha_pool_kernel(*refs, n_head, d_k, d_v, has_bias):
    if has_bias:
        (q_ref, k_ref, bias_ref, wq_ref, bq_ref, wkv_ref, bkv_ref,
         sel_ref, exp_ref, out_ref, attn_ref) = refs
    else:
        (q_ref, k_ref, wq_ref, bq_ref, wkv_ref, bkv_ref,
         sel_ref, exp_ref, out_ref, attn_ref) = refs
        bias_ref = None

    bt, l, d_ko = k_ref.shape
    h_dk = n_head * d_k
    h_dv = n_head * d_v

    q = q_ref[...]                                    # (bt, d_q)
    k_flat = k_ref[...].reshape(bt * l, d_ko)         # row merge (l % 8 == 0 -> free)

    # Fused projections: two wide MXU matmuls, f32 accumulation.
    # (1/temperature already folded into wq/bq by the wrapper.)
    qs = jnp.dot(q, wq_ref[...], preferred_element_type=jnp.float32) + bq_ref[...]         # (bt, H*d_k)
    kvs = jnp.dot(k_flat, wkv_ref[...], preferred_element_type=jnp.float32) + bkv_ref[...]  # (bt*l, H*(d_k+d_v))

    ks = kvs[:, :h_dk].reshape(bt, l, h_dk)           # (bt, l, H*d_k)
    vs = kvs[:, h_dk:].reshape(bt, l, h_dv)           # (bt, l, H*d_v)

    # Per-head logits: VPU broadcast-multiply + ONE segmented lane reduction
    # (constant 0/1 block-diagonal selector) -> (bt, l, H).  No M=1 matmuls.
    p = ks * qs[:, None, :]                                            # VPU
    logits = jnp.dot(p.reshape(bt * l, h_dk), sel_ref[...],
                     preferred_element_type=jnp.float32).reshape(bt, l, n_head)

    if bias_ref is not None:
        # Additive mask / key-padding bias (0 = keep, -1e30 = drop).
        logits = logits + bias_ref[...][:, :, None]

    # Numerically stable softmax over l (sublane axis), all heads at once.
    m = jnp.max(logits, axis=1, keepdims=True)
    e = jnp.exp(logits - m)
    denom = jnp.sum(e, axis=1, keepdims=True)
    attn = e * pl.reciprocal(denom, approx=True)                       # EUP reciprocal

    # Pooling: broadcast each head's attn row across its d_v lane group with a
    # constant 0/1 expander, then VPU multiply + one sublane reduction over l.
    attn_wide = jnp.dot(attn.reshape(bt * l, n_head), exp_ref[...],
                        preferred_element_type=jnp.float32).reshape(bt, l, h_dv)
    out = jnp.sum(attn_wide * vs, axis=1)                              # (bt, H*d_v)

    # Single full-width stores per grid step (lane-dense final layouts).
    out_ref[...] = out.astype(out_ref.dtype)
    attn_ref[...] = jnp.swapaxes(attn, 1, 2).astype(attn_ref.dtype)    # (bt, H, l)


def _pick_batch_tile(b, per_row_bytes, budget_bytes):
    """Largest multiple-of-8 divisor of b fitting the VMEM budget, preferring
    >= 2 grid steps (v7x megacore); falls back to the whole batch."""
    if b % 8 != 0:
        return b
    divisors = [d for d in range(8, b // 2 + 1, 8) if b % d == 0]
    fitting = [d for d in divisors if d * per_row_bytes <= budget_bytes]
    if fitting:
        return max(fitting)
    if divisors:
        return min(divisors)  # TODO(synk): tile l (flash-style) instead of shrinking bt.
    return b


def multihead_att_pool(q, k, params, n_head, mask=None, *, compute_dtype=jnp.bfloat16):
    """Returns (output (b, n_head*d_v), attn (n_head*b, l)) — matches PyTorch.

    mask: optional (b, l) boolean, True = keep (PyTorch semantics).
    Note: the module ties d_v == d_k == d_k_original // n_head.
    """
    b, d_q = q.shape
    b2, l, d_ko = k.shape
    assert b2 == b
    assert d_ko % n_head == 0
    d_k = d_ko // n_head
    d_v = d_k
    h_dk = n_head * d_k
    h_dv = n_head * d_v
    temperature = float(np.sqrt(d_k))

    # Pad l to a multiple of 8 so the (bt, l) row merges/splits in the kernel
    # never cross (8,128) tile padding; padded keys are masked via the bias.
    l_pad = ((l + 7) // 8) * 8
    pad = l_pad - l
    kx = jnp.pad(k, ((0, 0), (0, pad), (0, 0))) if pad else k

    has_bias = (mask is not None) or (pad > 0)
    bias = None
    if has_bias:
        valid = mask.astype(bool) if mask is not None else jnp.ones((b, l), dtype=bool)
        if pad:
            valid = jnp.concatenate([valid, jnp.zeros((b, pad), dtype=bool)], axis=1)
        bias = jnp.where(valid, 0.0, -1e30).astype(jnp.float32)

    # Pre-transpose to (in, out); fold 1/temperature into the Q projection;
    # fuse the K and V projections into a single matmul.
    wq_t = (params["wq"].T / temperature).astype(compute_dtype)                   # (d_q,  H*d_k)
    wkv_t = jnp.concatenate([params["wk"].T, params["wv"].T], axis=1).astype(compute_dtype)  # (d_ko, H*(d_k+d_v))
    bq = (params["bq"] / temperature).reshape(1, h_dk).astype(jnp.float32)
    bkv = jnp.concatenate([params["bk"], params["bv"]]).reshape(1, h_dk + h_dv).astype(jnp.float32)

    # Constant 0/1 selectors: block-diagonal head reduction and lane expander.
    sel = (jnp.arange(h_dk)[:, None] // d_k == jnp.arange(n_head)[None, :]).astype(jnp.float32)   # (H*d_k, H)
    expand = (jnp.arange(n_head)[:, None] == jnp.arange(h_dv)[None, :] // d_v).astype(jnp.float32)  # (H, H*d_v)

    qx = q.astype(compute_dtype)
    kx = kx.astype(compute_dtype)

    # VMEM-budget-driven batch tile.
    in_bytes = jnp.dtype(compute_dtype).itemsize
    try:
        vmem_cap = int(pltpu.get_tpu_info().vmem_capacity_bytes)
    except Exception:
        vmem_cap = 64 * 1024 * 1024  # conservative (v7x per-core) fallback
    budget = int(vmem_cap * 0.55)
    resident = 2 * ((d_q * h_dk + d_ko * (h_dk + h_dv)) * in_bytes
                    + (2 * h_dk + h_dv) * 4 + (h_dk * n_head + n_head * h_dv) * 4)
    per_row = (2 * (d_q + l_pad * d_ko) * in_bytes                 # q + k blocks, double-buffered
               + (2 * l_pad * 4 if has_bias else 0)                # bias block
               + 2 * (h_dv + n_head * l_pad) * 4                   # output blocks
               + 4 * l_pad * (h_dk + h_dv) * 4)                    # f32 intermediates (rough)
    bt = _pick_batch_tile(b, per_row, max(budget - resident, per_row * 8))
    grid = (b // bt,)
    # TODO(synk): for very long l on v7x (64 MiB VMEM/TC), additionally tile l with a
    # flash-style online softmax instead of shrinking bt.
    # TODO(synk): on v5e/v6e with VMEM headroom, bump the k BlockSpec to
    # pipeline_mode=pl.Buffered(3) if the k DMA is not fully hidden.

    kernel = functools.partial(_mha_pool_kernel, n_head=n_head, d_k=d_k, d_v=d_v,
                               has_bias=has_bias)

    in_specs = [
        pl.BlockSpec((bt, d_q), lambda i: (i, 0)),
        pl.BlockSpec((bt, l_pad, d_ko), lambda i: (i, 0, 0)),
    ]
    args = [qx, kx]
    if has_bias:
        in_specs.append(pl.BlockSpec((bt, l_pad), lambda i: (i, 0)))
        args.append(bias)
    in_specs += [
        # Tiny weights / biases / selectors: whole-array blocks with constant
        # index_maps (DMA'd once, stay resident in VMEM).
        pl.BlockSpec((d_q, h_dk), lambda i: (0, 0)),
        pl.BlockSpec((1, h_dk), lambda i: (0, 0)),
        pl.BlockSpec((d_ko, h_dk + h_dv), lambda i: (0, 0)),
        pl.BlockSpec((1, h_dk + h_dv), lambda i: (0, 0)),
        pl.BlockSpec((h_dk, n_head), lambda i: (0, 0)),
        pl.BlockSpec((n_head, h_dv), lambda i: (0, 0)),
    ]
    args += [wq_t, bq, wkv_t, bkv, sel, expand]

    out, attn_bhl = pl.pallas_call(
        kernel,
        grid=grid,
        in_specs=in_specs,
        out_specs=[
            pl.BlockSpec((bt, h_dv), lambda i: (i, 0)),
            pl.BlockSpec((bt, n_head, l_pad), lambda i: (i, 0, 0)),
        ],
        out_shape=[
            jax.ShapeDtypeStruct((b, h_dv), jnp.float32),
            # TODO(synk): emit attn in bfloat16 if downstream tolerates it (halves writeback).
            jax.ShapeDtypeStruct((b, n_head, l_pad), jnp.float32),
        ],
        compiler_params=pltpu.CompilerParams(
            dimension_semantics=("parallel",),
            vmem_limit_bytes=max(32 * 1024 * 1024,
                                 min(budget + resident, int(vmem_cap * 0.75))),
        ),
    )(*args)

    if pad:
        attn_bhl = attn_bhl[:, :, :l]
    # Only a free head-major transpose/merge remains on the host (PyTorch layout).
    attn = jnp.transpose(attn_bhl, (1, 0, 2)).reshape(n_head * b, l)
    return out, attn


def _reference(q, k, params, n_head, mask=None):
    b, d_q = q.shape
    _, l, d_ko = k.shape
    d_k = d_ko // n_head
    d_v = d_k
    temperature = float(np.sqrt(d_k))

    qs = (q @ params["wq"].T + params["bq"]).reshape(b, n_head, d_k)
    ks = (k.reshape(b * l, d_ko) @ params["wk"].T + params["bk"]).reshape(b, l, n_head, d_k)
    vs = (k.reshape(b * l, d_ko) @ params["wv"].T + params["bv"]).reshape(b, l, n_head, d_v)

    qs = jnp.transpose(qs, (1, 0, 2)).reshape(n_head * b, d_k)
    ks = jnp.transpose(ks, (2, 0, 1, 3)).reshape(n_head * b, l, d_k)
    vs = jnp.transpose(vs, (2, 0, 1, 3)).reshape(n_head * b, l, d_v)

    attn = jnp.sum(qs[:, None, :] * ks, axis=2) / temperature
    if mask is not None:
        fill = jnp.tile(~mask.astype(bool), (n_head, 1))
        attn = jnp.where(fill, -jnp.inf, attn)
    attn = jax.nn.softmax(attn, axis=1)
    out = jnp.sum(attn[:, :, None] * vs, axis=1)

    out = out.reshape(n_head, b, d_v).transpose(1, 0, 2).reshape(b, n_head * d_v)
    return out, attn


if __name__ == "__main__":
    n_head = 4
    d_q_original = 32
    d_k_original = 32
    b, l = 2, 8
    d_k = d_k_original // n_head
    d_v = d_k

    key = jax.random.PRNGKey(0)
    keys = jax.random.split(key, 10)

    std_q = float(np.sqrt(2.0 / (d_q_original + d_k)))
    std_k = float(np.sqrt(2.0 / (d_k_original + d_k)))
    std_v = float(np.sqrt(2.0 / (d_k_original + d_v)))
    params = {
        "wq": std_q * jax.random.normal(keys[0], (n_head * d_k, d_q_original), jnp.float32),
        "wk": std_k * jax.random.normal(keys[1], (n_head * d_k, d_k_original), jnp.float32),
        "wv": std_v * jax.random.normal(keys[2], (n_head * d_v, d_k_original), jnp.float32),
        "bq": 0.01 * jax.random.normal(keys[3], (n_head * d_k,), jnp.float32),
        "bk": 0.01 * jax.random.normal(keys[4], (n_head * d_k,), jnp.float32),
        "bv": 0.01 * jax.random.normal(keys[5], (n_head * d_v,), jnp.float32),
    }

    q = jax.random.normal(keys[6], (b, d_q_original), jnp.float32)
    k = jax.random.normal(keys[7], (b, l, d_k_original), jnp.float32)

    # 1) f32 compute path, no mask (tight check; approx reciprocal tolerance).
    out, attn = multihead_att_pool(q, k, params, n_head, compute_dtype=jnp.float32)
    jax.block_until_ready((out, attn))
    ref_out, ref_attn = _reference(q, k, params, n_head)
    assert out.shape == (b, n_head * d_v)
    assert attn.shape == (n_head * b, l)
    assert jnp.allclose(out, ref_out, atol=2e-3, rtol=2e-3)
    assert jnp.allclose(attn, ref_attn, atol=2e-3, rtol=2e-3)

    # 2) f32 path with the optional boolean mask and a non-multiple-of-8 l
    #    (exercises the additive-bias + key-padding path).
    l2 = 6
    k2 = jax.random.normal(keys[8], (b, l2, d_k_original), jnp.float32)
    mask2 = jnp.arange(l2)[None, :] < jnp.array([[4], [6]])      # True = keep
    out_m, attn_m = multihead_att_pool(q, k2, params, n_head, mask=mask2,
                                       compute_dtype=jnp.float32)
    jax.block_until_ready((out_m, attn_m))
    ref_out_m, ref_attn_m = _reference(q, k2, params, n_head, mask=mask2)
    assert out_m.shape == (b, n_head * d_v) and attn_m.shape == (n_head * b, l2)
    assert jnp.allclose(out_m, ref_out_m, atol=2e-3, rtol=2e-3)
    assert jnp.allclose(attn_m, ref_attn_m, atol=2e-3, rtol=2e-3)

    # 3) Default bfloat16 compute path (fast MXU/DMA path; loose numeric check).
    out_bf, attn_bf = multihead_att_pool(q, k, params, n_head)
    jax.block_until_ready((out_bf, attn_bf))
    assert jnp.allclose(out_bf, ref_out, atol=1e-1, rtol=1e-1)
    assert jnp.allclose(attn_bf, ref_attn, atol=1e-1, rtol=1e-1)

    print("KERNEL_OK")
</pallas_src>

<mosaic_0001>
module attributes {stable_mosaic.version = 11 : i64} {
  func.func @_mha_pool_kernel(%arg0: i32, %arg1: memref<2x32xf32, #tpu.memory_space<vmem>>, %arg2: memref<2x8x32xf32, #tpu.memory_space<vmem>>, %arg3: memref<32x32xf32, #tpu.memory_space<vmem>>, %arg4: memref<1x32xf32, #tpu.memory_space<vmem>>, %arg5: memref<32x64xf32, #tpu.memory_space<vmem>>, %arg6: memref<1x64xf32, #tpu.memory_space<vmem>>, %arg7: memref<32x4xf32, #tpu.memory_space<vmem>>, %arg8: memref<4x32xf32, #tpu.memory_space<vmem>>, %arg9: memref<2x32xf32, #tpu.memory_space<vmem>>, %arg10: memref<2x4x8xf32, #tpu.memory_space<vmem>>) attributes {dimension_semantics = [#tpu.dimension_semantics<parallel>], iteration_bounds = array<i64: 1>, scalar_prefetch = 0 : i64, scratch_operands = 0 : i64, tpu.core_type = #tpu.core_type<tc>, window_params = [{transform_indices = @transform_0, window_bounds = array<i64: 2, 32>}, {transform_indices = @transform_1, window_bounds = array<i64: 2, 8, 32>}, {pipeline_mode = #tpu.pipeline_mode<synchronous>, transform_indices = @transform_2, window_bounds = array<i64: 32, 32>}, {pipeline_mode = #tpu.pipeline_mode<synchronous>, transform_indices = @transform_3, window_bounds = array<i64: 1, 32>}, {pipeline_mode = #tpu.pipeline_mode<synchronous>, transform_indices = @transform_4, window_bounds = array<i64: 32, 64>}, {pipeline_mode = #tpu.pipeline_mode<synchronous>, transform_indices = @transform_5, window_bounds = array<i64: 1, 64>}, {pipeline_mode = #tpu.pipeline_mode<synchronous>, transform_indices = @transform_6, window_bounds = array<i64: 32, 4>}, {pipeline_mode = #tpu.pipeline_mode<synchronous>, transform_indices = @transform_7, window_bounds = array<i64: 4, 32>}, {transform_indices = @transform_8, window_bounds = array<i64: 2, 32>}, {transform_indices = @transform_9, window_bounds = array<i64: 2, 4, 8>}]} {
    %c0 = arith.constant 0 : index
    %c0_0 = arith.constant 0 : index
    %0 = vector.load %arg1[%c0, %c0_0] : memref<2x32xf32, #tpu.memory_space<vmem>>, vector<2x32xf32>
    %c0_1 = arith.constant 0 : index
    %c0_2 = arith.constant 0 : index
    %c0_3 = arith.constant 0 : index
    %1 = vector.load %arg2[%c0_1, %c0_2, %c0_3] : memref<2x8x32xf32, #tpu.memory_space<vmem>>, vector<2x8x32xf32>
    %2 = vector.shape_cast %1 : vector<2x8x32xf32> to vector<16x32xf32>
    %c0_4 = arith.constant 0 : index
    %c0_5 = arith.constant 0 : index
    %3 = vector.load %arg3[%c0_4, %c0_5] : memref<32x32xf32, #tpu.memory_space<vmem>>, vector<32x32xf32>
    %cst = arith.constant dense<0.000000e+00> : vector<2x32xf32>
    %4 = tpu.matmul %0, %3, %cst {dimension_numbers = #tpu.dot_dimension_numbers<[1], [0], [0], [1], [0, 0, 1, 1], [], []>} : vector<2x32xf32>, vector<32x32xf32>, vector<2x32xf32> -> vector<2x32xf32>
    %c0_6 = arith.constant 0 : index
    %c0_7 = arith.constant 0 : index
    %5 = vector.load %arg4[%c0_6, %c0_7] : memref<1x32xf32, #tpu.memory_space<vmem>>, vector<1x32xf32>
    %6 = vector.broadcast %5 : vector<1x32xf32> to vector<2x32xf32>
    %7 = arith.addf %4, %6 : vector<2x32xf32>
    %c0_8 = arith.constant 0 : index
    %c0_9 = arith.constant 0 : index
    %8 = vector.load %arg5[%c0_8, %c0_9] : memref<32x64xf32, #tpu.memory_space<vmem>>, vector<32x64xf32>
    %cst_10 = arith.constant dense<0.000000e+00> : vector<16x64xf32>
    %9 = tpu.matmul %2, %8, %cst_10 {dimension_numbers = #tpu.dot_dimension_numbers<[1], [0], [0], [1], [0, 0, 1, 1], [], []>} : vector<16x32xf32>, vector<32x64xf32>, vector<16x64xf32> -> vector<16x64xf32>
    %c0_11 = arith.constant 0 : index
    %c0_12 = arith.constant 0 : index
    %10 = vector.load %arg6[%c0_11, %c0_12] : memref<1x64xf32, #tpu.memory_space<vmem>>, vector<1x64xf32>
    %11 = vector.broadcast %10 : vector<1x64xf32> to vector<16x64xf32>
    %12 = arith.addf %9, %11 : vector<16x64xf32>
    %13 = vector.extract_strided_slice %12 {offsets = [0, 0], sizes = [16, 32], strides = [1, 1]} : vector<16x64xf32> to vector<16x32xf32>
    %14 = vector.shape_cast %13 : vector<16x32xf32> to vector<2x8x32xf32>
    %15 = vector.extract_strided_slice %12 {offsets = [0, 32], sizes = [16, 32], strides = [1, 1]} : vector<16x64xf32> to vector<16x32xf32>
    %16 = vector.shape_cast %15 : vector<16x32xf32> to vector<2x8x32xf32>
    %17 = vector.shape_cast %7 : vector<2x32xf32> to vector<2x1x32xf32>
    %18 = vector.broadcast %17 : vector<2x1x32xf32> to vector<2x8x32xf32>
    %19 = arith.mulf %14, %18 : vector<2x8x32xf32>
    %20 = vector.shape_cast %19 : vector<2x8x32xf32> to vector<16x32xf32>
    %c0_13 = arith.constant 0 : index
    %c0_14 = arith.constant 0 : index
    %21 = vector.load %arg7[%c0_13, %c0_14] : memref<32x4xf32, #tpu.memory_space<vmem>>, vector<32x4xf32>
    %cst_15 = arith.constant dense<0.000000e+00> : vector<16x4xf32>
    %22 = tpu.matmul %20, %21, %cst_15 {dimension_numbers = #tpu.dot_dimension_numbers<[1], [0], [0], [1], [0, 0, 1, 1], [], []>} : vector<16x32xf32>, vector<32x4xf32>, vector<16x4xf32> -> vector<16x4xf32>
    %23 = vector.shape_cast %22 : vector<16x4xf32> to vector<2x8x4xf32>
    %cst_16 = arith.constant dense<0xFF800000> : vector<2x4xf32>
    %24 = vector.multi_reduction <maximumf>, %23, %cst_16 [1] : vector<2x8x4xf32> to vector<2x4xf32>
    %25 = vector.shape_cast %24 : vector<2x4xf32> to vector<2x1x4xf32>
    %26 = vector.broadcast %25 : vector<2x1x4xf32> to vector<2x8x4xf32>
    %27 = arith.subf %23, %26 : vector<2x8x4xf32>
    %28 = math.exp %27 : vector<2x8x4xf32>
    %cst_17 = arith.constant dense<0.000000e+00> : vector<2x4xf32>
    %29 = vector.multi_reduction <add>, %28, %cst_17 [1] : vector<2x8x4xf32> to vector<2x4xf32>
    %30 = vector.shape_cast %29 : vector<2x4xf32> to vector<2x1x4xf32>
    %31 = tpu.reciprocal %30 {approx = true} : vector<2x1x4xf32> -> vector<2x1x4xf32>
    %32 = vector.broadcast %31 : vector<2x1x4xf32> to vector<2x8x4xf32>
    %33 = arith.mulf %28, %32 : vector<2x8x4xf32>
    %34 = vector.shape_cast %33 : vector<2x8x4xf32> to vector<16x4xf32>
    %c0_18 = arith.constant 0 : index
    %c0_19 = arith.constant 0 : index
    %35 = vector.load %arg8[%c0_18, %c0_19] : memref<4x32xf32, #tpu.memory_space<vmem>>, vector<4x32xf32>
    %cst_20 = arith.constant dense<0.000000e+00> : vector<16x32xf32>
    %36 = tpu.matmul %34, %35, %cst_20 {dimension_numbers = #tpu.dot_dimension_numbers<[1], [0], [0], [1], [0, 0, 1, 1], [], []>} : vector<16x4xf32>, vector<4x32xf32>, vector<16x32xf32> -> vector<16x32xf32>
    %37 = vector.shape_cast %36 : vector<16x32xf32> to vector<2x8x32xf32>
    %38 = arith.mulf %37, %16 : vector<2x8x32xf32>
    %cst_21 = arith.constant dense<0.000000e+00> : vector<2x32xf32>
    %39 = vector.multi_reduction <add>, %38, %cst_21 [1] : vector<2x8x32xf32> to vector<2x32xf32>
    %c0_22 = arith.constant 0 : index
    %c0_23 = arith.constant 0 : index
    %40 = vector.load %arg9[%c0_22, %c0_23] : memref<2x32xf32, #tpu.memory_space<vmem>>, vector<2x32xf32>
    tpu.vector_store %arg9[%c0_22, %c0_23], %39 {strides = array<i32>} : memref<2x32xf32, #tpu.memory_space<vmem>>, vector<2x32xf32>,
    %41 = tpu.transpose %33, [0, 2, 1] : vector<2x8x4xf32> -> vector<2x4x8xf32>
    %c0_24 = arith.constant 0 : index
    %c0_25 = arith.constant 0 : index
    %c0_26 = arith.constant 0 : index
    %42 = vector.load %arg10[%c0_24, %c0_25, %c0_26] : memref<2x4x8xf32, #tpu.memory_space<vmem>>, vector<2x4x8xf32>
    tpu.vector_store %arg10[%c0_24, %c0_25, %c0_26], %41 {strides = array<i32>} : memref<2x4x8xf32, #tpu.memory_space<vmem>>, vector<2x4x8xf32>,
    return
  }
  func.func @transform_0(%arg0: i32) -> (i32, i32) {
    %c0_i32 = arith.constant 0 : i32
    %c0_i32_0 = arith.constant 0 : i32
    return %arg0, %c0_i32 : i32, i32
  }
  func.func @transform_1(%arg0: i32) -> (i32, i32, i32) {
    %c0_i32 = arith.constant 0 : i32
    %c0_i32_0 = arith.constant 0 : i32
    %c0_i32_1 = arith.constant 0 : i32
    return %arg0, %c0_i32, %c0_i32_0 : i32, i32, i32
  }
  func.func @transform_2(%arg0: i32) -> (i32, i32) {
    %c0_i32 = arith.constant 0 : i32
    %c0_i32_0 = arith.constant 0 : i32
    %c0_i32_1 = arith.constant 0 : i32
    return %c0_i32, %c0_i32_0 : i32, i32
  }
  func.func @transform_3(%arg0: i32) -> (i32, i32) {
    %c0_i32 = arith.constant 0 : i32
    %c0_i32_0 = arith.constant 0 : i32
    %c0_i32_1 = arith.constant 0 : i32
    return %c0_i32, %c0_i32_0 : i32, i32
  }
  func.func @transform_4(%arg0: i32) -> (i32, i32) {
    %c0_i32 = arith.constant 0 : i32
    %c0_i32_0 = arith.constant 0 : i32
    %c0_i32_1 = arith.constant 0 : i32
    return %c0_i32, %c0_i32_0 : i32, i32
  }
  func.func @transform_5(%arg0: i32) -> (i32, i32) {
    %c0_i32 = arith.constant 0 : i32
    %c0_i32_0 = arith.constant 0 : i32
    %c0_i32_1 = arith.constant 0 : i32
    return %c0_i32, %c0_i32_0 : i32, i32
  }
  func.func @transform_6(%arg0: i32) -> (i32, i32) {
    %c0_i32 = arith.constant 0 : i32
    %c0_i32_0 = arith.constant 0 : i32
    %c0_i32_1 = arith.constant 0 : i32
    return %c0_i32, %c0_i32_0 : i32, i32
  }
  func.func @transform_7(%arg0: i32) -> (i32, i32) {
    %c0_i32 = arith.constant 0 : i32
    %c0_i32_0 = arith.constant 0 : i32
    %c0_i32_1 = arith.constant 0 : i32
    return %c0_i32, %c0_i32_0 : i32, i32
  }
  func.func @transform_8(%arg0: i32) -> (i32, i32) {
    %c0_i32 = arith.constant 0 : i32
    %c0_i32_0 = arith.constant 0 : i32
    return %arg0, %c0_i32 : i32, i32
  }
  func.func @transform_9(%arg0: i32) -> (i32, i32, i32) {
    %c0_i32 = arith.constant 0 : i32
    %c0_i32_0 = arith.constant 0 : i32
    %c0_i32_1 = arith.constant 0 : i32
    return %arg0, %c0_i32, %c0_i32_0 : i32, i32, i32
  }
}

</mosaic_0001>

<llo_original>
// kernel: tpu_custom_call.1
$region0: #{tpu_custom_call.1}
  #allocation0 [shape = 'u32[]', space=smem, size = 0x4, offset = 0x4, fixed_abs, tag = 'smem constant byte address 0x4 - core index']
  #allocation1 [shape = 'u32[144,128]{1,0:T(1,128)}', space=vmem, size = 0x12000, scoped, tag = 'internal scratch']
  %s0 = inlined_call_operand.vmem [shape: f32[2,32], index: 0, kind: input, shape index: {}]
  %s1 = inlined_call_operand.hbm [shape: f32[2,8,32], index: 1, kind: input, shape index: {}]
  %s2 = inlined_call_operand.vmem [shape: f32[32,32], index: 2, kind: input, shape index: {}]
  %s3 = inlined_call_operand.vmem [shape: f32[1,32], index: 3, kind: input, shape index: {}]
  %s4 = inlined_call_operand.hbm [shape: f32[32,64], index: 4, kind: input, shape index: {}]
  %s5 = inlined_call_operand.vmem [shape: f32[1,64], index: 5, kind: input, shape index: {}]
  %s6 = inlined_call_operand.vmem [shape: f32[32,4], index: 6, kind: input, shape index: {}]
  %s7 = inlined_call_operand.vmem [shape: f32[4,32], index: 7, kind: input, shape index: {}]
  %s8 = inlined_call_operand.hbm [shape: f32[2,32], index: 8, kind: output, shape index: {0}]
  %s9 = inlined_call_operand.hbm [shape: f32[2,4,8], index: 9, kind: output, shape index: {1}]
  %10 = xla_tuple %s8, %s9
  %s11 = sld [smem:[#allocation0]]
  $region58: #{tpu_custom_call.1} parent=0
    _
  %s13 = ssub.s32 1, %s11
  %s14 = scalar_select 0, %s13, %s11
  $region1: #{tpu_custom_call.1} parent=0
    #allocation2 [shape = 'u8[8192]{0}', space=vmem, size = 0x2000, scoped, tag = 'input window, operand 1, single buffered']
    #allocation3 [shape = 's32[1]{0}', space=sflag, size = 0x4, scoped, tag = 'scoped memory for tpu_custom_call.1']
    #allocation4 [shape = 's32[1]{0}', space=sflag, size = 0x4, scoped, tag = 'scoped memory for tpu_custom_call.1']
    #allocation5 [shape = 'u8[16384]{0}', space=vmem, size = 0x4000, scoped, tag = 'input window, operand 4, single buffered']
    #allocation6 [shape = 's32[1]{0}', space=sflag, size = 0x4, scoped, tag = 'scoped memory for tpu_custom_call.1']
    #allocation7 [shape = 'u8[1024]{0}', space=vmem, size = 0x400, scoped, tag = 'output window, operand 0, single buffered']
    #allocation8 [shape = 'u8[4096]{0}', space=vmem, size = 0x1000, scoped, tag = 'output window, operand 1, single buffered']
    #allocation9 [shape = 's32[1]{0}', space=sflag, size = 0x4, scoped, tag = 'scoped memory for tpu_custom_call.1']
    %15 = vsyncpa [#allocation3], 0
    %16 = vsyncpa [#allocation6], 0
    %17 = vsyncpa [#allocation4], 0
    %18 = vsyncpa [#allocation9], 0
    // Predicated region
    $region2: #{tpu_custom_call.1} parent=1 // pred_check
      _
    $region3: #{tpu_custom_call.1} parent=1 // pred_check_branch
      %20 = sbr.rel (0) target = $region5
    $region4: #{tpu_custom_call.1} parent=1 // pred_region
      _
    $region5: #{tpu_custom_call.1} parent=1 // pred_fallthru
      _
    // Predicated region
    $region6: #{tpu_custom_call.1} parent=1 // pred_check
      _
    $region7: #{tpu_custom_call.1} parent=1 // pred_check_branch
      %22 = sbr.rel (0) target = $region9
    $region8: #{tpu_custom_call.1} parent=1 // pred_region
      %s24 = ssub.s32 256, 256
      %25 = vsyncadd [#allocation3], %s24
      %s26 = sshll.u32 [#allocation2], 4
      %s27 = int_to_ptr.vmem [resolvable:$true] %s26
      %32 = dma.hbm_to_vmem [thread:$0]  %s1, 256, %s27, [#allocation3], 128, 128, 8
    $region9: #{tpu_custom_call.1} parent=1 // pred_fallthru
      _
    // Predicated region
    $region10: #{tpu_custom_call.1} parent=1 // pred_check
      _
    $region11: #{tpu_custom_call.1} parent=1 // pred_check_branch
      %34 = sbr.rel (0) target = $region13
    $region12: #{tpu_custom_call.1} parent=1 // pred_region
      _
    $region13: #{tpu_custom_call.1} parent=1 // pred_fallthru
      _
    // Predicated region
    $region14: #{tpu_custom_call.1} parent=1 // pred_check
      _
    $region15: #{tpu_custom_call.1} parent=1 // pred_check_branch
      %36 = sbr.rel (0) target = $region17
    $region16: #{tpu_custom_call.1} parent=1 // pred_region
      _
    $region17: #{tpu_custom_call.1} parent=1 // pred_fallthru
      _
    // Predicated region
    $region18: #{tpu_custom_call.1} parent=1 // pred_check
      _
    $region19: #{tpu_custom_call.1} parent=1 // pred_check_branch
      %38 = sbr.rel (0) target = $region21
    $region20: #{tpu_custom_call.1} parent=1 // pred_region
      %s40 = ssub.s32 512, 512
      %41 = vsyncadd [#allocation6], %s40
      %s42 = sshll.u32 [#allocation5], 4
      %s43 = int_to_ptr.vmem [resolvable:$true] %s42
      %48 = dma.hbm_to_vmem [thread:$0]  %s4, 512, %s43, [#allocation6], 128, 128, 8
    $region21: #{tpu_custom_call.1} parent=1 // pred_fallthru
      _
    // Predicated region
    $region22: #{tpu_custom_call.1} parent=1 // pred_check
      _
    $region23: #{tpu_custom_call.1} parent=1 // pred_check_branch
      %50 = sbr.rel (0) target = $region25
    $region24: #{tpu_custom_call.1} parent=1 // pred_region
      _
    $region25: #{tpu_custom_call.1} parent=1 // pred_fallthru
      _
    // Predicated region
    $region26: #{tpu_custom_call.1} parent=1 // pred_check
      _
    $region27: #{tpu_custom_call.1} parent=1 // pred_check_branch
      %52 = sbr.rel (0) target = $region29
    $region28: #{tpu_custom_call.1} parent=1 // pred_region
      _
    $region29: #{tpu_custom_call.1} parent=1 // pred_fallthru
      _
    // Predicated region
    $region30: #{tpu_custom_call.1} parent=1 // pred_check
      _
    $region31: #{tpu_custom_call.1} parent=1 // pred_check_branch
      %54 = sbr.rel (0) target = $region33
    $region32: #{tpu_custom_call.1} parent=1 // pred_region
      _
    $region33: #{tpu_custom_call.1} parent=1 // pred_fallthru
      _
    // Predicated region
    $region34: #{tpu_custom_call.1} parent=1 // pred_check
      _
    $region35: #{tpu_custom_call.1} parent=1 // pred_check_branch
      %56 = sbr.rel (0) target = $region37
    $region36: #{tpu_custom_call.1} parent=1 // pred_region
      %57 = dma.done [#allocation3], 256
    $region37: #{tpu_custom_call.1} parent=1 // pred_fallthru
      _
    // Predicated region
    $region38: #{tpu_custom_call.1} parent=1 // pred_check
      _
    $region39: #{tpu_custom_call.1} parent=1 // pred_check_branch
      %59 = sbr.rel (0) target = $region41
    $region40: #{tpu_custom_call.1} parent=1 // pred_region
      %60 = dma.done [#allocation6], 512
    $region41: #{tpu_custom_call.1} parent=1 // pred_fallthru
      _
    %v61 = vld [vmem:[%s0] sm:$0x3]
    %v62 = vld [vmem:[#allocation2] sm:$0xff]
    %v63 = vld [vmem:[#allocation2 + $0x8] sm:$0xff]
    %v64 = vld [vmem:[%s2] sm:$0xff]
    %v65 = vld [vmem:[%s2 + $0x8] sm:$0xff]
    %v66 = vld [vmem:[%s2 + $0x10] sm:$0xff]
    %v67 = vld [vmem:[%s2 + $0x18] sm:$0xff]
    %v68 = vld [vmem:[%s3] sm:$0x1]
    %v70 = vlaneseq
    %v71 = vshrl.u32 %v70, 7
    %v72 = vsub.s32 0, %v71
    %v73 = vrot.slane %v68, %v72
    %vm75 = vcmask 261120
    %v77 = vsel %vm75, %v61, 0
    %79 = vmatprep.subr.mxu0 0.0
    %80 = vmatpush1.msra.mxu0 %v64
    %81 = vmatprep.subr.mxu0 0.0
    %82 = vmatpush1.msra.mxu0 %v65
    %83 = vmatprep.subr.mxu0 0.0
    %84 = vmatpush1.msra.mxu0 %v66
    %85 = vmatprep.subr.mxu0 0.0
    %86 = vmatpush1.msra.mxu0 %v67
    %87 = vmatprep.subr.mxu0 0.0
    %88 = vmatpush1.msra.mxu0 0.0
    %89 = vmatprep.subr.mxu0 0.0
    %90 = vmatpush1.msra.mxu0 0.0
    %91 = vmatprep.subr.mxu0 0.0
    %92 = vmatpush1.msra.mxu0 0.0
    %93 = vmatprep.subr.mxu0 0.0
    %94 = vmatpush1.msra.mxu0 0.0
    %95 = vmatprep.subr.mxu0 0.0
    %96 = vmatpush1.msra.mxu0 0.0
    %97 = vmatprep.subr.mxu0 0.0
    %98 = vmatpush1.msra.mxu0 0.0
    %99 = vmatprep.subr.mxu0 0.0
    %100 = vmatpush1.msra.mxu0 0.0
    %101 = vmatprep.subr.mxu0 0.0
    %102 = vmatpush1.msra.mxu0 0.0
    %103 = vmatprep.subr.mxu0 0.0
    %104 = vmatpush1.msra.mxu0 0.0
    %105 = vmatprep.subr.mxu0 0.0
    %106 = vmatpush1.msra.mxu0 0.0
    %107 = vmatprep.subr.mxu0 0.0
    %108 = vmatpush1.msra.mxu0 0.0
    %109 = vmatprep.subr.mxu0 0.0
    %110 = vmatpush1.msra.mxu0 0.0
    %111 = vmatprep.subr.mxu0 0.0
    %112 = vmatpush1.msra.mxu0 0.0
    %113 = vmatprep.subr.mxu0 0.0
    %114 = vmatpush1.msra.mxu0 0.0
    %115 = vmatprep.subr.mxu0 0.0
    %116 = vmatpush1.msra.mxu0 0.0
    %117 = vmatprep.subr.mxu0 0.0
    %118 = vmatpush1.msra.mxu0 0.0
    %119 = vmatprep.subr.mxu0 0.0
    %120 = vmatpush1.msra.mxu0 0.0
    %121 = vmatprep.subr.mxu0 0.0
    %122 = vmatpush1.msra.mxu0 0.0
    %123 = vmatprep.subr.mxu0 0.0
    %124 = vmatpush1.msra.mxu0 0.0
    %125 = vmatprep.subr.mxu0 0.0
    %126 = vmatpush1.msra.mxu0 0.0
    %127 = vmatprep.subr.mxu0 0.0
    %128 = vmatpush1.msra.mxu0 0.0
    %129 = vmatprep.subr.mxu0 0.0
    %130 = vmatpush1.msra.mxu0 0.0
    %131 = vmatprep.subr.mxu0 0.0
    %132 = vmatpush1.msra.mxu0 0.0
    %133 = vmatprep.subr.mxu0 0.0
    %134 = vmatpush1.msra.mxu0 0.0
    %135 = vmatprep.subr.mxu0 0.0
    %136 = vmatpush1.msra.mxu0 0.0
    %137 = vmatprep.subr.mxu0 0.0
    %138 = vmatpush1.msra.mxu0 0.0
    %139 = vmatprep.subr.mxu0 0.0
    %140 = vmatpush1.msra.mxu0 0.0
    %141 = vmatprep.subr.mxu0 0.0
    %142 = vmatpush1.msra.mxu0 0.0
    %143 = vmatprep.mubr.f32.mxu0 0.0
    %144 = vmatmul.mubr.f32.gmra.mrb[0].mxu0 %v77
    %v145 = vpop.f32.mrb[0].mxu0
    %v146 = vadd.f32 %v73, %v145
    %v147 = vpop.f32.mrb[0].mxu0
    %148 = vdwg.mxu0
    %v149 = vld [vmem:[#allocation5] sm:$0xff]
    %v150 = vld [vmem:[#allocation5 + $0x8] sm:$0xff]
    %v151 = vld [vmem:[#allocation5 + $0x10] sm:$0xff]
    %v152 = vld [vmem:[#allocation5 + $0x18] sm:$0xff]
    %v153 = vld [vmem:[%s5] sm:$0x1]
    %v155 = vlaneseq
    %v156 = vshrl.u32 %v155, 7
    %v157 = vsub.s32 0, %v156
    %v158 = vrot.slane %v153, %v157
    %v161 = vsel %vm75, %v62, 0
    %v164 = vsel %vm75, %v63, 0
    %166 = vmatprep.subr.mxu0 0.0
    %167 = vmatpush1.msra.mxu0 %v149
    %168 = vmatprep.subr.mxu0 0.0
    %169 = vmatpush1.msra.mxu0 %v150
    %170 = vmatprep.subr.mxu0 0.0
    %171 = vmatpush1.msra.mxu0 %v151
    %172 = vmatprep.subr.mxu0 0.0
    %173 = vmatpush1.msra.mxu0 %v152
    %174 = vmatprep.subr.mxu0 0.0
    %175 = vmatpush1.msra.mxu0 0.0
    %176 = vmatprep.subr.mxu0 0.0
    %177 = vmatpush1.msra.mxu0 0.0
    %178 = vmatprep.subr.mxu0 0.0
    %179 = vmatpush1.msra.mxu0 0.0
    %180 = vmatprep.subr.mxu0 0.0
    %181 = vmatpush1.msra.mxu0 0.0
    %182 = vmatprep.subr.mxu0 0.0
    %183 = vmatpush1.msra.mxu0 0.0
    %184 = vmatprep.subr.mxu0 0.0
    %185 = vmatpush1.msra.mxu0 0.0
    %186 = vmatprep.subr.mxu0 0.0
    %187 = vmatpush1.msra.mxu0 0.0
    %188 = vmatprep.subr.mxu0 0.0
    %189 = vmatpush1.msra.mxu0 0.0
    %190 = vmatprep.subr.mxu0 0.0
    %191 = vmatpush1.msra.mxu0 0.0
    %192 = vmatprep.subr.mxu0 0.0
    %193 = vmatpush1.msra.mxu0 0.0
    %194 = vmatprep.subr.mxu0 0.0
    %195 = vmatpush1.msra.mxu0 0.0
    %196 = vmatprep.subr.mxu0 0.0
    %197 = vmatpush1.msra.mxu0 0.0
    %198 = vmatprep.subr.mxu0 0.0
    %199 = vmatpush1.msra.mxu0 0.0
    %200 = vmatprep.subr.mxu0 0.0
    %201 = vmatpush1.msra.mxu0 0.0
    %202 = vmatprep.subr.mxu0 0.0
    %203 = vmatpush1.msra.mxu0 0.0
    %204 = vmatprep.subr.mxu0 0.0
    %205 = vmatpush1.msra.mxu0 0.0
    %206 = vmatprep.subr.mxu0 0.0
    %207 = vmatpush1.msra.mxu0 0.0
    %208 = vmatprep.subr.mxu0 0.0
    %209 = vmatpush1.msra.mxu0 0.0
    %210 = vmatprep.subr.mxu0 0.0
    %211 = vmatpush1.msra.mxu0 0.0
    %212 = vmatprep.subr.mxu0 0.0
    %213 = vmatpush1.msra.mxu0 0.0
    %214 = vmatprep.subr.mxu0 0.0
    %215 = vmatpush1.msra.mxu0 0.0
    %216 = vmatprep.subr.mxu0 0.0
    %217 = vmatpush1.msra.mxu0 0.0
    %218 = vmatprep.subr.mxu0 0.0
    %219 = vmatpush1.msra.mxu0 0.0
    %220 = vmatprep.subr.mxu0 0.0
    %221 = vmatpush1.msra.mxu0 0.0
    %222 = vmatprep.subr.mxu0 0.0
    %223 = vmatpush1.msra.mxu0 0.0
    %224 = vmatprep.subr.mxu0 0.0
    %225 = vmatpush1.msra.mxu0 0.0
    %226 = vmatprep.subr.mxu0 0.0
    %227 = vmatpush1.msra.mxu0 0.0
    %228 = vmatprep.subr.mxu0 0.0
    %229 = vmatpush1.msra.mxu0 0.0
    %230 = vmatprep.mubr.f32.mxu0 0.0
    %231 = vmatmul.mubr.f32.gmra.mrb[0].mxu0 %v161
    %v232 = vpop.f32.mrb[0].mxu0
    %v233 = vadd.f32 %v158, %v232
    %v234 = vpop.f32.mrb[0].mxu0
    %235 = vmatprep.mubr.f32.mxu0 0.0
    %236 = vmatmul.mubr.f32.gmra.mrb[0].mxu0 %v164
    %v237 = vpop.f32.mrb[0].mxu0
    %v238 = vadd.f32 %v158, %v237
    %v239 = vpop.f32.mrb[0].mxu0
    %240 = vdwg.mxu0
    %v243 = vunpack.c.l.s4 1966171168
    %v244 = vunpack.c.0.s8 %v243
    %v245 = vlaneseq
    %v246 = vshrl.u32 %v245, 7
    %v247 = vsub.s32 %v244, %v246
    %v248 = vrot.slane %v146, %v247
    %v249 = vcombine.high %v248, %v248
    %v251 = vunpack.c.l.s4 1966171168
    %v252 = vunpack.c.0.s8 %v251
    %v253 = vlaneseq
    %v254 = vshrl.u32 %v253, 7
    %v255 = vsub.s32 %v252, %v254
    %v256 = vrot.slane %v248, %v255
    %v258 = vunpack.c.l.s4 1966171168
    %v259 = vunpack.c.0.s8 %v258
    %v260 = vlaneseq
    %v261 = vshrl.u32 %v260, 7
    %v262 = vsub.s32 %v259, %v261
    %v263 = vrot.slane %v249, %v262
    %v264 = vlaneseq
    %v265 = vshrl.u32 %v264, 7
    %v266 = vsub.s32 0, %v265
    %v267 = vrot.slane %v256, %v266
    %v268 = vlaneseq
    %v269 = vshrl.u32 %v268, 7
    %v270 = vsub.s32 0, %v269
    %v271 = vrot.slane %v263, %v270
    %v274 = vmul.f32 %v233, %v267
    %v275 = vmul.f32 %v238, %v271
    %v276 = vld [vmem:[%s6] sm:$0xff]
    %v277 = vld [vmem:[%s6 + $0x8] sm:$0xff]
    %v278 = vld [vmem:[%s6 + $0x10] sm:$0xff]
    %v279 = vld [vmem:[%s6 + $0x18] sm:$0xff]
    %v281 = vsel %vm75, %v274, 0
    %v284 = vsel %vm75, %v275, 0
    %286 = vmatprep.subr.mxu0 0.0
    %287 = vmatpush1.msra.mxu0 %v276
    %288 = vmatprep.subr.mxu0 0.0
    %289 = vmatpush1.msra.mxu0 %v277
    %290 = vmatprep.subr.mxu0 0.0
    %291 = vmatpush1.msra.mxu0 %v278
    %292 = vmatprep.subr.mxu0 0.0
    %293 = vmatpush1.msra.mxu0 %v279
    %294 = vmatprep.subr.mxu0 0.0
    %295 = vmatpush1.msra.mxu0 0.0
    %296 = vmatprep.subr.mxu0 0.0
    %297 = vmatpush1.msra.mxu0 0.0
    %298 = vmatprep.subr.mxu0 0.0
    %299 = vmatpush1.msra.mxu0 0.0
    %300 = vmatprep.subr.mxu0 0.0
    %301 = vmatpush1.msra.mxu0 0.0
    %302 = vmatprep.subr.mxu0 0.0
    %303 = vmatpush1.msra.mxu0 0.0
    %304 = vmatprep.subr.mxu0 0.0
    %305 = vmatpush1.msra.mxu0 0.0
    %306 = vmatprep.subr.mxu0 0.0
    %307 = vmatpush1.msra.mxu0 0.0
    %308 = vmatprep.subr.mxu0 0.0
    %309 = vmatpush1.msra.mxu0 0.0
    %310 = vmatprep.subr.mxu0 0.0
    %311 = vmatpush1.msra.mxu0 0.0
    %312 = vmatprep.subr.mxu0 0.0
    %313 = vmatpush1.msra.mxu0 0.0
    %314 = vmatprep.subr.mxu0 0.0
    %315 = vmatpush1.msra.mxu0 0.0
    %316 = vmatprep.subr.mxu0 0.0
    %317 = vmatpush1.msra.mxu0 0.0
    %318 = vmatprep.subr.mxu0 0.0
    %319 = vmatpush1.msra.mxu0 0.0
    %320 = vmatprep.subr.mxu0 0.0
    %321 = vmatpush1.msra.mxu0 0.0
    %322 = vmatprep.subr.mxu0 0.0
    %323 = vmatpush1.msra.mxu0 0.0
    %324 = vmatprep.subr.mxu0 0.0
    %325 = vmatpush1.msra.mxu0 0.0
    %326 = vmatprep.subr.mxu0 0.0
    %327 = vmatpush1.msra.mxu0 0.0
    %328 = vmatprep.subr.mxu0 0.0
    %329 = vmatpush1.msra.mxu0 0.0
    %330 = vmatprep.subr.mxu0 0.0
    %331 = vmatpush1.msra.mxu0 0.0
    %332 = vmatprep.subr.mxu0 0.0
    %333 = vmatpush1.msra.mxu0 0.0
    %334 = vmatprep.subr.mxu0 0.0
    %335 = vmatpush1.msra.mxu0 0.0
    %336 = vmatprep.subr.mxu0 0.0
    %337 = vmatpush1.msra.mxu0 0.0
    %338 = vmatprep.subr.mxu0 0.0
    %339 = vmatpush1.msra.mxu0 0.0
    %340 = vmatprep.subr.mxu0 0.0
    %341 = vmatpush1.msra.mxu0 0.0
    %342 = vmatprep.subr.mxu0 0.0
    %343 = vmatpush1.msra.mxu0 0.0
    %344 = vmatprep.subr.mxu0 0.0
    %345 = vmatpush1.msra.mxu0 0.0
    %346 = vmatprep.subr.mxu0 0.0
    %347 = vmatpush1.msra.mxu0 0.0
    %348 = vmatprep.subr.mxu0 0.0
    %349 = vmatpush1.msra.mxu0 0.0
    %350 = vmatprep.mubr.f32.mxu0 0.0
    %351 = vmatmul.mubr.f32.gmra.mrb[0].mxu0 %v281
    %v352 = vpop.f32.mrb[0].mxu0
    %v353 = vadd.f32 0.0, %v352
    %v354 = vpop.f32.mrb[0].mxu0
    %355 = vmatprep.mubr.f32.mxu0 0.0
    %356 = vmatmul.mubr.f32.gmra.mrb[0].mxu0 %v284
    %v357 = vpop.f32.mrb[0].mxu0
    %v358 = vadd.f32 0.0, %v357
    %v359 = vpop.f32.mrb[0].mxu0
    %360 = vdwg.mxu0
    %vm361 = vcmask 31744
    %v362 = vsel %vm361, %v353, -inf
    %v363 = vrot.slane %v362, 4
    %v364 = vmax.f32 %v362, %v363
    %v365 = vrot.slane %v364, 2
    %v366 = vmax.f32 %v364, %v365
    %v367 = vrot.slane %v366, 1
    %v368 = vmax.f32 %v366, %v367
    %v369 = vsel %vm361, %v358, -inf
    %v370 = vrot.slane %v369, 4
    %v371 = vmax.f32 %v369, %v370
    %v372 = vrot.slane %v371, 2
    %v373 = vmax.f32 %v371, %v372
    %v374 = vrot.slane %v373, 1
    %v375 = vmax.f32 %v373, %v374
    %v376 = vsub.f32 %v353, %v368
    %v377 = vsub.f32 %v358, %v375
    %v378 = vmul.f32 %v376, 1.442695
    %v379 = vpow.pop %v378
    %v380 = vmul.f32 %v377, 1.442695
    %v381 = vpow.pop %v380
    %v382 = vsel %vm361, %v379, 0.0
    %v383 = vrot.slane %v382, 4
    %v384 = vadd.f32 %v382, %v383
    %v385 = vrot.slane %v384, 2
    %v386 = vadd.f32 %v384, %v385
    %v387 = vrot.slane %v386, 1
    %v388 = vadd.f32 %v386, %v387
    %v389 = vsel %vm361, %v381, 0.0
    %v390 = vrot.slane %v389, 4
    %v391 = vadd.f32 %v389, %v390
    %v392 = vrot.slane %v391, 2
    %v393 = vadd.f32 %v391, %v392
    %v394 = vrot.slane %v393, 1
    %v395 = vadd.f32 %v393, %v394
    %v396 = vrcp.pop %v388
    %v397 = vrcp.pop %v395
    %v398 = vmul.f32 %v379, %v396
    %v399 = vmul.f32 %v381, %v397
    %v400 = vld [vmem:[%s7] sm:$0xf]
    %v402 = vsel %vm361, %v398, 0
    %v405 = vsel %vm361, %v399, 0
    %vm407 = vcmask 1043456
    %v409 = vsel %vm407, %v400, 0
    %411 = vmatprep.subr.mxu0 0.0
    %412 = vmatpush1.msra.mxu0 %v409
    %413 = vmatprep.subr.mxu0 0.0
    %414 = vmatpush1.msra.mxu0 0.0
    %415 = vmatprep.subr.mxu0 0.0
    %416 = vmatpush1.msra.mxu0 0.0
    %417 = vmatprep.subr.mxu0 0.0
    %418 = vmatpush1.msra.mxu0 0.0
    %419 = vmatprep.subr.mxu0 0.0
    %420 = vmatpush1.msra.mxu0 0.0
    %421 = vmatprep.subr.mxu0 0.0
    %422 = vmatpush1.msra.mxu0 0.0
    %423 = vmatprep.subr.mxu0 0.0
    %424 = vmatpush1.msra.mxu0 0.0
    %425 = vmatprep.subr.mxu0 0.0
    %426 = vmatpush1.msra.mxu0 0.0
    %427 = vmatprep.subr.mxu0 0.0
    %428 = vmatpush1.msra.mxu0 0.0
    %429 = vmatprep.subr.mxu0 0.0
    %430 = vmatpush1.msra.mxu0 0.0
    %431 = vmatprep.subr.mxu0 0.0
    %432 = vmatpush1.msra.mxu0 0.0
    %433 = vmatprep.subr.mxu0 0.0
    %434 = vmatpush1.msra.mxu0 0.0
    %435 = vmatprep.subr.mxu0 0.0
    %436 = vmatpush1.msra.mxu0 0.0
    %437 = vmatprep.subr.mxu0 0.0
    %438 = vmatpush1.msra.mxu0 0.0
    %439 = vmatprep.subr.mxu0 0.0
    %440 = vmatpush1.msra.mxu0 0.0
    %441 = vmatprep.subr.mxu0 0.0
    %442 = vmatpush1.msra.mxu0 0.0
    %443 = vmatprep.subr.mxu0 0.0
    %444 = vmatpush1.msra.mxu0 0.0
    %445 = vmatprep.subr.mxu0 0.0
    %446 = vmatpush1.msra.mxu0 0.0
    %447 = vmatprep.subr.mxu0 0.0
    %448 = vmatpush1.msra.mxu0 0.0
    %449 = vmatprep.subr.mxu0 0.0
    %450 = vmatpush1.msra.mxu0 0.0
    %451 = vmatprep.subr.mxu0 0.0
    %452 = vmatpush1.msra.mxu0 0.0
    %453 = vmatprep.subr.mxu0 0.0
    %454 = vmatpush1.msra.mxu0 0.0
    %455 = vmatprep.subr.mxu0 0.0
    %456 = vmatpush1.msra.mxu0 0.0
    %457 = vmatprep.subr.mxu0 0.0
    %458 = vmatpush1.msra.mxu0 0.0
    %459 = vmatprep.subr.mxu0 0.0
    %460 = vmatpush1.msra.mxu0 0.0
    %461 = vmatprep.subr.mxu0 0.0
    %462 = vmatpush1.msra.mxu0 0.0
    %463 = vmatprep.subr.mxu0 0.0
    %464 = vmatpush1.msra.mxu0 0.0
    %465 = vmatprep.subr.mxu0 0.0
    %466 = vmatpush1.msra.mxu0 0.0
    %467 = vmatprep.subr.mxu0 0.0
    %468 = vmatpush1.msra.mxu0 0.0
    %469 = vmatprep.subr.mxu0 0.0
    %470 = vmatpush1.msra.mxu0 0.0
    %471 = vmatprep.subr.mxu0 0.0
    %472 = vmatpush1.msra.mxu0 0.0
    %473 = vmatprep.subr.mxu0 0.0
    %474 = vmatpush1.msra.mxu0 0.0
    %475 = vmatprep.mubr.f32.mxu0 0.0
    %476 = vmatmul.mubr.f32.gmra.mrb[0].mxu0 %v402
    %v477 = vpop.f32.mrb[0].mxu0
    %v478 = vadd.f32 0.0, %v477
    %v479 = vpop.f32.mrb[0].mxu0
    %480 = vmatprep.mubr.f32.mxu0 0.0
    %481 = vmatmul.mubr.f32.gmra.mrb[0].mxu0 %v405
    %v482 = vpop.f32.mrb[0].mxu0
    %v483 = vadd.f32 0.0, %v482
    %v484 = vpop.f32.mrb[0].mxu0
    %485 = vdwg.mxu0
    %488 = vrot.lane.b32.xlu0 %v233, 96
    %v489 = vpop.permute.xlu0 %488
    %490 = vrot.lane.b32.xlu0 %v238, 96
    %v491 = vpop.permute.xlu0 %490
    %v494 = vmul.f32 %v478, %v489
    %v495 = vmul.f32 %v483, %v491
    %v496 = vsel %vm75, %v494, 0.0
    %v497 = vrot.slane %v496, 4
    %v498 = vadd.f32 %v496, %v497
    %v499 = vrot.slane %v498, 2
    %v500 = vadd.f32 %v498, %v499
    %v501 = vrot.slane %v500, 1
    %v502 = vadd.f32 %v500, %v501
    %v503 = vsel %vm75, %v495, 0.0
    %v504 = vrot.slane %v503, 4
    %v505 = vadd.f32 %v503, %v504
    %v506 = vrot.slane %v505, 2
    %v507 = vadd.f32 %v505, %v506
    %v508 = vrot.slane %v507, 1
    %v509 = vadd.f32 %v507, %v508
    %vm512 = vcmask 1041409
    %v513 = vsel %vm512, %v509, %v502
    %vm515 = vcmask 254976
    %516 = vst.msk [vmem:[#allocation7] sm:$0x3] %vm515, %v513
    %517 = vxpose.xlu0.b32.start [1/16] %v398, 128
    %518 = vxpose.xlu0.b32.cont [2/16] 0.0, 128
    %519 = vxpose.xlu0.b32.cont [3/16] 0.0, 128
    %520 = vxpose.xlu0.b32.cont [4/16] 0.0, 128
    %521 = vxpose.xlu0.b32.cont [5/16] 0.0, 128
    %522 = vxpose.xlu0.b32.cont [6/16] 0.0, 128
    %523 = vxpose.xlu0.b32.cont [7/16] 0.0, 128
    %524 = vxpose.xlu0.b32.cont [8/16] 0.0, 128
    %525 = vxpose.xlu0.b32.cont [9/16] 0.0, 128
    %526 = vxpose.xlu0.b32.cont [10/16] 0.0, 128
    %527 = vxpose.xlu0.b32.cont [11/16] 0.0, 128
    %528 = vxpose.xlu0.b32.cont [12/16] 0.0, 128
    %529 = vxpose.xlu0.b32.cont [13/16] 0.0, 128
    %530 = vxpose.xlu0.b32.cont [14/16] 0.0, 128
    %531 = vxpose.xlu0.b32.cont [15/16] 0.0, 128
    %532 = vxpose.xlu0.b32.end [16/16] 0.0, 128
    %v533 = vpop.trf.xlu0
    %v534 = vpop.trf.xlu0
    %v535 = vpop.trf.xlu0
    %v536 = vpop.trf.xlu0
    %v537 = vpop.trf.xlu0
    %v538 = vpop.trf.xlu0
    %v539 = vpop.trf.xlu0
    %v540 = vpop.trf.xlu0
    %v541 = vpop.trf.xlu0
    %v542 = vpop.trf.xlu0
    %v543 = vpop.trf.xlu0
    %v544 = vpop.trf.xlu0
    %v545 = vpop.trf.xlu0
    %v546 = vpop.trf.xlu0
    %v547 = vpop.trf.xlu0
    %v548 = vpop.trf.xlu0
    %549 = vxpose.xlu0.b32.start [1/16] %v399, 128
    %550 = vxpose.xlu0.b32.cont [2/16] 0.0, 128
    %551 = vxpose.xlu0.b32.cont [3/16] 0.0, 128
    %552 = vxpose.xlu0.b32.cont [4/16] 0.0, 128
    %553 = vxpose.xlu0.b32.cont [5/16] 0.0, 128
    %554 = vxpose.xlu0.b32.cont [6/16] 0.0, 128
    %555 = vxpose.xlu0.b32.cont [7/16] 0.0, 128
    %556 = vxpose.xlu0.b32.cont [8/16] 0.0, 128
    %557 = vxpose.xlu0.b32.cont [9/16] 0.0, 128
    %558 = vxpose.xlu0.b32.cont [10/16] 0.0, 128
    %559 = vxpose.xlu0.b32.cont [11/16] 0.0, 128
    %560 = vxpose.xlu0.b32.cont [12/16] 0.0, 128
    %561 = vxpose.xlu0.b32.cont [13/16] 0.0, 128
    %562 = vxpose.xlu0.b32.cont [14/16] 0.0, 128
    %563 = vxpose.xlu0.b32.cont [15/16] 0.0, 128
    %564 = vxpose.xlu0.b32.end [16/16] 0.0, 128
    %v565 = vpop.trf.xlu0
    %v566 = vpop.trf.xlu0
    %v567 = vpop.trf.xlu0
    %v568 = vpop.trf.xlu0
    %v569 = vpop.trf.xlu0
    %v570 = vpop.trf.xlu0
    %v571 = vpop.trf.xlu0
    %v572 = vpop.trf.xlu0
    %v573 = vpop.trf.xlu0
    %v574 = vpop.trf.xlu0
    %v575 = vpop.trf.xlu0
    %v576 = vpop.trf.xlu0
    %v577 = vpop.trf.xlu0
    %v578 = vpop.trf.xlu0
    %v579 = vpop.trf.xlu0
    %v580 = vpop.trf.xlu0
    %vm581 = vcmask 60416
    %582 = vst.msk [vmem:[#allocation8] sm:$0xf] %vm581, %v533
    %583 = vst.msk [vmem:[#allocation8 + $0x4] sm:$0xf] %vm581, %v565
    // Predicated region
    $region42: #{tpu_custom_call.1} parent=1 // pred_check
      _
    $region43: #{tpu_custom_call.1} parent=1 // pred_check_branch
      %585 = sbr.rel (0) target = $region45
    $region44: #{tpu_custom_call.1} parent=1 // pred_region
      %s587 = ssub.s32 32, 32
      %588 = vsyncadd [#allocation4], %s587
      %s590 = sshll.u32 [#allocation7], 4
      %s591 = int_to_ptr.vmem [resolvable:$true] %s590
      %593 = dma.vmem_to_hbm [thread:$0]  %s591, 32, %s8, [#allocation4]
    $region45: #{tpu_custom_call.1} parent=1 // pred_fallthru
      _
    // Predicated region
    $region46: #{tpu_custom_call.1} parent=1 // pred_check
      _
    $region47: #{tpu_custom_call.1} parent=1 // pred_check_branch
      %595 = sbr.rel (0) target = $region49
    $region48: #{tpu_custom_call.1} parent=1 // pred_region
      %s597 = ssub.s32 128, 128
      %598 = vsyncadd [#allocation9], %s597
      %s599 = sshll.u32 [#allocation8], 4
      %s600 = int_to_ptr.vmem [resolvable:$true] %s599
      %605 = dma.vmem_to_hbm [thread:$0]  %s600, 128, %s9, [#allocation9], 64, 64, 4
    $region49: #{tpu_custom_call.1} parent=1 // pred_fallthru
      _
    // Predicated region
    $region50: #{tpu_custom_call.1} parent=1 // pred_check
      _
    $region51: #{tpu_custom_call.1} parent=1 // pred_check_branch
      %607 = sbr.rel (0) target = $region53
    $region52: #{tpu_custom_call.1} parent=1 // pred_region
      %608 = dma.done [#allocation4], 32
    $region53: #{tpu_custom_call.1} parent=1 // pred_fallthru
      _
    // Predicated region
    $region54: #{tpu_custom_call.1} parent=1 // pred_check
      _
    $region55: #{tpu_custom_call.1} parent=1 // pred_check_branch
      %610 = sbr.rel (0) target = $region57
    $region56: #{tpu_custom_call.1} parent=1 // pred_region
      %611 = dma.done [#allocation9], 128
    $region57: #{tpu_custom_call.1} parent=1 // pred_fallthru
      _
    %612 = vsyncpa [#allocation3], 1
    %613 = vsyncpa [#allocation6], 1
    %614 = vsyncpa [#allocation4], 1
    %615 = vsyncpa [#allocation9], 1

</llo_original>
